<compile_context>
chip_gen: v7x
topology: tpu7x:2x2x1
jax: 0.10.0
libtpu: 0.0.40
codegen_flags: <defaults>
</compile_context>

<pallas_src>
import math
import functools

import jax
import jax.numpy as jnp
import numpy as np
from jax.experimental import pallas as pl
from jax.experimental.pallas import tpu as pltpu

# Small versions of the module constants (prod: c_m=256, c_z=128, r=100, s=50, c=32, N_head=8)
C_M = 64      # MSA channel dim
C_Z = 32      # pair channel dim
R = 16        # number of residues
S = 8         # number of sequences (== linear_b out_features)
C = 16        # per-head hidden dim
N_HEAD = 4    # number of heads

LN_EPS = 1e-5  # torch LayerNorm default


# --------------------------------------------------------------------------
# Kernel 1: pair bias.  One LayerNorm (affine folded into the weights) + one
# lane-dense bf16 matmul producing all heads at once; per-head slabs are
# written (bf16) so the host-side reshape to (H, S, R, R) is a free
# reinterpretation (same flat order as torch's .view(s, r, r)).
# --------------------------------------------------------------------------
def _pair_bias_kernel(pair_ref, wb_ref, bb_ref, out_ref, *, n_head, s):
    # pair_ref: (TILE, C_Z) f32   wb_ref: (C_Z, H*S) bf16   bb_ref: (1, H*S) f32
    # out_ref : (H, TILE, S) bf16
    x = pair_ref[...]
    mu = jnp.mean(x, axis=-1, keepdims=True)
    xc = x - mu
    var = jnp.mean(xc * xc, axis=-1, keepdims=True)
    p = xc * jax.lax.rsqrt(var + LN_EPS)                       # LN; affine folded away

    proj = jnp.dot(p.astype(jnp.bfloat16), wb_ref[...],
                   preferred_element_type=jnp.float32) + bb_ref[...]
    for h in range(n_head):                                    # static unroll
        out_ref[h] = proj[:, h * s:(h + 1) * s].astype(out_ref.dtype)


# --------------------------------------------------------------------------
# Kernel 2: fused MSA row attention for a block of sequences, all heads inside.
# --------------------------------------------------------------------------
def _msa_row_attn_kernel(msa_ref, bias_ref, wqkvg_ref, bqkvg_ref, wo_ref, bo_ref,
                         out_ref, o_slab_ref, *, n_head, c):
    # msa_ref : (TS, R, C_M) f32     bias_ref: (H, TS, R, R) bf16
    # wqkvg   : (C_M, 4*H*C) bf16    bqkvg   : (1, 1, 4*H*C) f32
    # wo_ref  : (H*C, C_M) bf16      bo_ref  : (1, 1, C_M) f32
    # out_ref : (TS, R, C_M) f32     o_slab  : (TS, R, H*C) bf16 VMEM scratch
    x = msa_ref[...]
    mu = jnp.mean(x, axis=-1, keepdims=True)
    xc = x - mu
    var = jnp.mean(xc * xc, axis=-1, keepdims=True)
    pm = xc * jax.lax.rsqrt(var + LN_EPS)                      # LN once; affine folded away

    # One fused bf16 projection for q/k/v/g over ALL heads (f32 accumulation).
    proj = jax.lax.dot_general(pm.astype(jnp.bfloat16), wqkvg_ref[...],
                               (((2,), (0,)), ((), ())),
                               preferred_element_type=jnp.float32) + bqkvg_ref[...]

    hc = n_head * c
    scale = 1.0 / math.sqrt(c)
    # Sigmoid hoisted out of the head loop: one lane-dense pass over all heads.
    g_all = jax.nn.sigmoid(proj[..., 3 * hc:4 * hc])

    for h in range(n_head):          # static unroll; per-head temps die at the slab store
        q = proj[..., 0 * hc + h * c: 0 * hc + (h + 1) * c].astype(jnp.bfloat16)
        k = proj[..., 1 * hc + h * c: 1 * hc + (h + 1) * c].astype(jnp.bfloat16)
        v = proj[..., 2 * hc + h * c: 2 * hc + (h + 1) * c].astype(jnp.bfloat16)

        # q @ k^T without materializing a transpose (batched over sequences).
        scores = jax.lax.dot_general(q, k, (((2,), (2,)), ((0,), (0,))),
                                     preferred_element_type=jnp.float32)   # (TS, R, R)
        pb = (scores + bias_ref[h].astype(jnp.float32)) * scale

        # torch nn.Softmax(dim=-2): normalize over the query axis.
        m = jnp.max(pb, axis=-2, keepdims=True)
        e = jnp.exp(pb - m)
        a = e * pl.reciprocal(jnp.sum(e, axis=-2, keepdims=True), approx=True)

        ov = jax.lax.dot_general(a.astype(jnp.bfloat16), v,
                                 (((2,), (1,)), ((0,), (0,))),
                                 preferred_element_type=jnp.float32)       # (TS, R, C)
        o = g_all[..., h * c:(h + 1) * c] * ov
        o_slab_ref[:, :, h * c:(h + 1) * c] = o.astype(jnp.bfloat16)

    # Fused concat(dim=2) + output Linear as ONE K=H*C matmul (full MXU depth).
    acc = jax.lax.dot_general(o_slab_ref[...], wo_ref[...],
                              (((2,), (0,)), ((), ())),
                              preferred_element_type=jnp.float32)
    out_ref[...] = (acc + bo_ref[...]).astype(out_ref.dtype)


# --------------------------------------------------------------------------
# Block-size selection helpers.
# --------------------------------------------------------------------------
def _pick_block(total, cap, step):
    """Largest divisor of `total` that is a multiple of `step` and <= cap,
    preferring an even grid length (total // block) for 2-TC (v7x) chips."""
    cands = [d for d in range(step, min(cap, total) + 1, step) if total % d == 0]
    if not cands:
        return total
    even = [d for d in cands if (total // d) % 2 == 0]
    return max(even) if even else max(cands)


# --------------------------------------------------------------------------
# Wrapper: host-side weight folding/fusion + the two pallas_calls.
# --------------------------------------------------------------------------
def msa_row_attention_with_pair_bias(msa, pair, params, *, seq_block=None, rr_block=None):
    s_, r_, c_m = msa.shape
    c_z = pair.shape[-1]
    n_head, _, c = params['wq'].shape
    hc = n_head * c
    rr = r_ * r_

    # ---- one-time host-side parameter transforms (LN affines folded into weights) ----
    g_m, b_m = params['ln_msa_g'], params['ln_msa_b']          # (H, C_M)

    def fold_msa(w):                                           # w: (H, C_M, C)
        wf = jnp.transpose(g_m[:, :, None] * w, (1, 0, 2)).reshape(c_m, hc)
        bf = jnp.einsum('hm,hmc->hc', b_m, w).reshape(hc)
        return wf, bf

    wq_f, bq_f = fold_msa(params['wq'])
    wk_f, bk_f = fold_msa(params['wk'])
    wv_f, bv_f = fold_msa(params['wv'])
    wg_f, bg_f = fold_msa(params['wg'])
    w_qkvg = jnp.concatenate([wq_f, wk_f, wv_f, wg_f], axis=1).astype(jnp.bfloat16)
    b_qkvg = jnp.concatenate([bq_f, bk_f, bv_f, bg_f]).reshape(1, 1, 4 * hc)   # f32

    g_z, b_z, wb = params['ln_pair_g'], params['ln_pair_b'], params['wb']
    wb_f = (jnp.transpose(g_z[:, :, None] * wb, (1, 0, 2))
            .reshape(c_z, n_head * s_).astype(jnp.bfloat16))                   # (C_Z, H*S)
    bb_f = jnp.einsum('hz,hzs->hs', b_z, wb).reshape(1, n_head * s_)           # f32

    wo = params['w_out'].astype(jnp.bfloat16)                  # (H*C, C_M), torch W^T
    bo = params['b_out'].reshape(1, 1, c_m)                    # f32

    # ---- Kernel 1: pair bias (bf16), tiled over the R*R row axis ----
    if rr_block is None or rr % rr_block != 0:
        # multiple of 16 (bf16 sublane packing), <= 2048, divides rr (prod 10000 -> 2000)
        rr_block = _pick_block(rr, 2048, step=16)
    pair_flat = pair.reshape(rr, c_z)

    bias_hrs = pl.pallas_call(
        functools.partial(_pair_bias_kernel, n_head=n_head, s=s_),
        out_shape=jax.ShapeDtypeStruct((n_head, rr, s_), jnp.bfloat16),
        grid_spec=pltpu.PrefetchScalarGridSpec(
            num_scalar_prefetch=0,
            grid=(rr // rr_block,),
            in_specs=[
                pl.BlockSpec((rr_block, c_z), lambda t: (t, 0)),
                pl.BlockSpec((c_z, n_head * s_), lambda t: (0, 0),
                             pipeline_mode=pl.Buffered(1)),
                pl.BlockSpec((1, n_head * s_), lambda t: (0, 0),
                             pipeline_mode=pl.Buffered(1)),
            ],
            out_specs=pl.BlockSpec((n_head, rr_block, s_), lambda t: (0, t, 0)),
        ),
        compiler_params=pltpu.CompilerParams(dimension_semantics=("parallel",)),
    )(pair_flat, wb_f, bb_f)

    # Same flat order as torch's b.view(s, r, r): pure reinterpretation, no transpose.
    bias_all = bias_hrs.reshape(n_head, s_, r_, r_)

    # ---- Kernel 2: fused attention over sequence blocks ----
    if seq_block is None or s_ % seq_block != 0:
        # <= 10 sequences per step (v7x VMEM budget), even grid preferred (prod 50 -> 5)
        seq_block = _pick_block(s_, 10, step=1)

    # VMEM budget: double-buffered varying blocks + resident (single-buffered) weights
    # + f32 temporaries; 2x headroom, clamped to [32 MiB, 64 MiB] (safe on v5e/v6e/v7x).
    lane = 128
    blk = (2 * seq_block * r_ * max(c_m, lane) * 4                      # msa + out (f32)
           + n_head * seq_block * r_ * max(r_, lane) * 2)               # bias (bf16)
    wts = c_m * 4 * hc * 2 + 4 * hc * 4 + hc * max(c_m, lane) * 2 + c_m * 4
    tmp = (seq_block * r_ * max(4 * hc, lane) * 4                       # f32 proj
           + 3 * seq_block * r_ * max(r_, lane) * 4                     # scores / e / a
           + seq_block * r_ * max(hc, lane) * 2)                        # o slab scratch
    vmem_limit = int(min(max(2 * (blk + wts + tmp), 32 * 2 ** 20), 64 * 2 ** 20))

    out = pl.pallas_call(
        functools.partial(_msa_row_attn_kernel, n_head=n_head, c=c),
        out_shape=jax.ShapeDtypeStruct((s_, r_, c_m), jnp.float32),
        grid_spec=pltpu.PrefetchScalarGridSpec(
            num_scalar_prefetch=0,
            grid=(s_ // seq_block,),
            in_specs=[
                pl.BlockSpec((seq_block, r_, c_m), lambda sb: (sb, 0, 0)),         # msa block
                pl.BlockSpec((n_head, seq_block, r_, r_), lambda sb: (0, sb, 0, 0)),  # bias
                pl.BlockSpec((c_m, 4 * hc), lambda sb: (0, 0),
                             pipeline_mode=pl.Buffered(1)),                        # W_qkvg
                pl.BlockSpec((1, 1, 4 * hc), lambda sb: (0, 0, 0),
                             pipeline_mode=pl.Buffered(1)),                        # b_qkvg
                pl.BlockSpec((hc, c_m), lambda sb: (0, 0),
                             pipeline_mode=pl.Buffered(1)),                        # W_out
                pl.BlockSpec((1, 1, c_m), lambda sb: (0, 0, 0),
                             pipeline_mode=pl.Buffered(1)),                        # b_out
            ],
            out_specs=pl.BlockSpec((seq_block, r_, c_m), lambda sb: (sb, 0, 0)),
            scratch_shapes=[pltpu.VMEM((seq_block, r_, hc), jnp.bfloat16)],        # o slab
        ),
        compiler_params=pltpu.CompilerParams(
            dimension_semantics=("parallel",),
            vmem_limit_bytes=vmem_limit),
    )(msa, bias_all, w_qkvg, b_qkvg, wo, bo)
    return out


# --------------------------------------------------------------------------
# Pure-JAX (f32) mirror of the torch forward pass (for correctness check).
# --------------------------------------------------------------------------
def reference(msa, pair, params, eps=LN_EPS):
    s_, r_, c_m = msa.shape
    c_z = pair.shape[-1]
    n_head, _, c = params['wq'].shape

    def ln(x, g, b):
        mu = jnp.mean(x, axis=-1, keepdims=True)
        var = jnp.mean((x - mu) ** 2, axis=-1, keepdims=True)
        return (x - mu) / jnp.sqrt(var + eps) * g + b

    pair_flat = pair.reshape(-1, c_z)
    outs = []
    for h in range(n_head):
        pm = ln(msa, params['ln_msa_g'][h], params['ln_msa_b'][h])
        q = pm @ params['wq'][h]
        k = pm @ params['wk'][h]
        v = pm @ params['wv'][h]
        g = jax.nn.sigmoid(pm @ params['wg'][h])
        pp = ln(pair_flat, params['ln_pair_g'][h], params['ln_pair_b'][h])
        b = (pp @ params['wb'][h]).reshape(s_, r_, r_)          # == torch .view(s, r, r)
        pb = (jnp.einsum('sqc,skc->sqk', q, k) + b) / np.sqrt(c)
        a = jax.nn.softmax(pb, axis=-2)
        o = g * jnp.einsum('sqk,skc->sqc', a, v)
        outs.append(o)
    cat = jnp.concatenate(outs, axis=-1)
    return cat @ params['w_out'] + params['b_out']


if __name__ == "__main__":
    key = jax.random.PRNGKey(0)
    ks = jax.random.split(key, 13)

    def nrm(k, shape, scale=0.1):
        return scale * jax.random.normal(k, shape, dtype=jnp.float32)

    params = {
        'ln_msa_g':  1.0 + nrm(ks[0], (N_HEAD, C_M)),
        'ln_msa_b':  nrm(ks[1], (N_HEAD, C_M)),
        'wq':        nrm(ks[2], (N_HEAD, C_M, C)),
        'wk':        nrm(ks[3], (N_HEAD, C_M, C)),
        'wv':        nrm(ks[4], (N_HEAD, C_M, C)),
        'wg':        nrm(ks[5], (N_HEAD, C_M, C)),
        'ln_pair_g': 1.0 + nrm(ks[6], (N_HEAD, C_Z)),
        'ln_pair_b': nrm(ks[7], (N_HEAD, C_Z)),
        'wb':        nrm(ks[8], (N_HEAD, C_Z, S)),
        'w_out':     nrm(ks[9], (N_HEAD * C, C_M)),   # torch W^T of the final Linear
        'b_out':     nrm(ks[10], (C_M,)),
    }
    msa = jax.random.normal(ks[11], (S, R, C_M), dtype=jnp.float32)
    pair = jax.random.normal(ks[12], (R, R, C_Z), dtype=jnp.float32)

    # Defaults pick seq_block=4 (grid 2) and rr_block=128 (grid 2) at these shapes.
    out = jax.block_until_ready(msa_row_attention_with_pair_bias(msa, pair, params))
    ref = reference(msa, pair, params)

    assert out.shape == (S, R, C_M), out.shape
    err = float(jnp.max(jnp.abs(out - ref)))
    # bf16 MXU operands (f32 accumulation) + approx reciprocal => relaxed tolerance
    # vs. the exact f32 reference.
    assert err < 5e-2, f"max abs err {err}"
    print("KERNEL_OK")
</pallas_src>

<mosaic_0001>
module attributes {stable_mosaic.version = 11 : i64} {
  func.func @_pair_bias_kernel(%arg0: i32, %arg1: memref<128x32xf32, #tpu.memory_space<vmem>>, %arg2: memref<32x32xbf16, #tpu.memory_space<vmem>>, %arg3: memref<1x32xf32, #tpu.memory_space<vmem>>, %arg4: memref<4x128x8xbf16, #tpu.memory_space<vmem>>) attributes {dimension_semantics = [#tpu.dimension_semantics<parallel>], iteration_bounds = array<i64: 2>, scalar_prefetch = 0 : i64, scratch_operands = 0 : i64, tpu.core_type = #tpu.core_type<tc>, window_params = [{transform_indices = @transform_0, window_bounds = array<i64: 128, 32>}, {pipeline_mode = #tpu.pipeline_mode<synchronous>, transform_indices = @transform_1, window_bounds = array<i64: 32, 32>}, {pipeline_mode = #tpu.pipeline_mode<synchronous>, transform_indices = @transform_2, window_bounds = array<i64: 1, 32>}, {transform_indices = @transform_3, window_bounds = array<i64: 4, 128, 8>}]} {
    %c0 = arith.constant 0 : index
    %c0_0 = arith.constant 0 : index
    %0 = vector.load %arg1[%c0, %c0_0] : memref<128x32xf32, #tpu.memory_space<vmem>>, vector<128x32xf32>
    %cst = arith.constant dense<0.000000e+00> : vector<128xf32>
    %1 = vector.multi_reduction <add>, %0, %cst [1] : vector<128x32xf32> to vector<128xf32>
    %2 = vector.shape_cast %1 : vector<128xf32> to vector<128x1xf32>
    %cst_1 = arith.constant 3.200000e+01 : f32
    %3 = vector.broadcast %cst_1 : f32 to vector<128x1xf32>
    %4 = arith.divf %2, %3 : vector<128x1xf32>
    %5 = vector.broadcast %4 : vector<128x1xf32> to vector<128x32xf32>
    %6 = arith.subf %0, %5 : vector<128x32xf32>
    %7 = arith.mulf %6, %6 : vector<128x32xf32>
    %cst_2 = arith.constant dense<0.000000e+00> : vector<128xf32>
    %8 = vector.multi_reduction <add>, %7, %cst_2 [1] : vector<128x32xf32> to vector<128xf32>
    %9 = vector.shape_cast %8 : vector<128xf32> to vector<128x1xf32>
    %cst_3 = arith.constant 3.200000e+01 : f32
    %10 = vector.broadcast %cst_3 : f32 to vector<128x1xf32>
    %11 = arith.divf %9, %10 : vector<128x1xf32>
    %cst_4 = arith.constant 9.99999974E-6 : f32
    %12 = vector.broadcast %cst_4 : f32 to vector<128x1xf32>
    %13 = arith.addf %11, %12 : vector<128x1xf32>
    %14 = math.rsqrt %13 : vector<128x1xf32>
    %15 = vector.broadcast %14 : vector<128x1xf32> to vector<128x32xf32>
    %16 = arith.mulf %6, %15 : vector<128x32xf32>
    %17 = arith.truncf %16 : vector<128x32xf32> to vector<128x32xbf16>
    %c0_5 = arith.constant 0 : index
    %c0_6 = arith.constant 0 : index
    %18 = vector.load %arg2[%c0_5, %c0_6] : memref<32x32xbf16, #tpu.memory_space<vmem>>, vector<32x32xbf16>
    %cst_7 = arith.constant dense<0.000000e+00> : vector<128x32xf32>
    %19 = tpu.matmul %17, %18, %cst_7 {dimension_numbers = #tpu.dot_dimension_numbers<[1], [0], [0], [1], [0, 0, 1, 1], [], []>} : vector<128x32xbf16>, vector<32x32xbf16>, vector<128x32xf32> -> vector<128x32xf32>
    %c0_8 = arith.constant 0 : index
    %c0_9 = arith.constant 0 : index
    %20 = vector.load %arg3[%c0_8, %c0_9] : memref<1x32xf32, #tpu.memory_space<vmem>>, vector<1x32xf32>
    %21 = vector.broadcast %20 : vector<1x32xf32> to vector<128x32xf32>
    %22 = arith.addf %19, %21 : vector<128x32xf32>
    %23 = vector.extract_strided_slice %22 {offsets = [0, 0], sizes = [128, 8], strides = [1, 1]} : vector<128x32xf32> to vector<128x8xf32>
    %24 = arith.truncf %23 : vector<128x8xf32> to vector<128x8xbf16>
    %c0_10 = arith.constant 0 : index
    %c0_11 = arith.constant 0 : index
    %c0_12 = arith.constant 0 : index
    %25 = vector.load %arg4[%c0_10, %c0_11, %c0_12] : memref<4x128x8xbf16, #tpu.memory_space<vmem>>, vector<1x128x8xbf16>
    %26 = vector.shape_cast %25 : vector<1x128x8xbf16> to vector<128x8xbf16>
    %27 = vector.shape_cast %24 : vector<128x8xbf16> to vector<1x128x8xbf16>
    tpu.vector_store %arg4[%c0_10, %c0_11, %c0_12], %27 {strides = array<i32>} : memref<4x128x8xbf16, #tpu.memory_space<vmem>>, vector<1x128x8xbf16>,
    %28 = vector.extract_strided_slice %22 {offsets = [0, 8], sizes = [128, 8], strides = [1, 1]} : vector<128x32xf32> to vector<128x8xf32>
    %29 = arith.truncf %28 : vector<128x8xf32> to vector<128x8xbf16>
    %c1 = arith.constant 1 : index
    %c0_13 = arith.constant 0 : index
    %c0_14 = arith.constant 0 : index
    %30 = vector.load %arg4[%c1, %c0_13, %c0_14] : memref<4x128x8xbf16, #tpu.memory_space<vmem>>, vector<1x128x8xbf16>
    %31 = vector.shape_cast %30 : vector<1x128x8xbf16> to vector<128x8xbf16>
    %32 = vector.shape_cast %29 : vector<128x8xbf16> to vector<1x128x8xbf16>
    tpu.vector_store %arg4[%c1, %c0_13, %c0_14], %32 {strides = array<i32>} : memref<4x128x8xbf16, #tpu.memory_space<vmem>>, vector<1x128x8xbf16>,
    %33 = vector.extract_strided_slice %22 {offsets = [0, 16], sizes = [128, 8], strides = [1, 1]} : vector<128x32xf32> to vector<128x8xf32>
    %34 = arith.truncf %33 : vector<128x8xf32> to vector<128x8xbf16>
    %c2 = arith.constant 2 : index
    %c0_15 = arith.constant 0 : index
    %c0_16 = arith.constant 0 : index
    %35 = vector.load %arg4[%c2, %c0_15, %c0_16] : memref<4x128x8xbf16, #tpu.memory_space<vmem>>, vector<1x128x8xbf16>
    %36 = vector.shape_cast %35 : vector<1x128x8xbf16> to vector<128x8xbf16>
    %37 = vector.shape_cast %34 : vector<128x8xbf16> to vector<1x128x8xbf16>
    tpu.vector_store %arg4[%c2, %c0_15, %c0_16], %37 {strides = array<i32>} : memref<4x128x8xbf16, #tpu.memory_space<vmem>>, vector<1x128x8xbf16>,
    %38 = vector.extract_strided_slice %22 {offsets = [0, 24], sizes = [128, 8], strides = [1, 1]} : vector<128x32xf32> to vector<128x8xf32>
    %39 = arith.truncf %38 : vector<128x8xf32> to vector<128x8xbf16>
    %c3 = arith.constant 3 : index
    %c0_17 = arith.constant 0 : index
    %c0_18 = arith.constant 0 : index
    %40 = vector.load %arg4[%c3, %c0_17, %c0_18] : memref<4x128x8xbf16, #tpu.memory_space<vmem>>, vector<1x128x8xbf16>
    %41 = vector.shape_cast %40 : vector<1x128x8xbf16> to vector<128x8xbf16>
    %42 = vector.shape_cast %39 : vector<128x8xbf16> to vector<1x128x8xbf16>
    tpu.vector_store %arg4[%c3, %c0_17, %c0_18], %42 {strides = array<i32>} : memref<4x128x8xbf16, #tpu.memory_space<vmem>>, vector<1x128x8xbf16>,
    return
  }
  func.func @transform_0(%arg0: i32) -> (i32, i32) {
    %c0_i32 = arith.constant 0 : i32
    %c0_i32_0 = arith.constant 0 : i32
    return %arg0, %c0_i32 : i32, i32
  }
  func.func @transform_1(%arg0: i32) -> (i32, i32) {
    %c0_i32 = arith.constant 0 : i32
    %c0_i32_0 = arith.constant 0 : i32
    %c0_i32_1 = arith.constant 0 : i32
    return %c0_i32, %c0_i32_0 : i32, i32
  }
  func.func @transform_2(%arg0: i32) -> (i32, i32) {
    %c0_i32 = arith.constant 0 : i32
    %c0_i32_0 = arith.constant 0 : i32
    %c0_i32_1 = arith.constant 0 : i32
    return %c0_i32, %c0_i32_0 : i32, i32
  }
  func.func @transform_3(%arg0: i32) -> (i32, i32, i32) {
    %c0_i32 = arith.constant 0 : i32
    %c0_i32_0 = arith.constant 0 : i32
    %c0_i32_1 = arith.constant 0 : i32
    return %c0_i32, %arg0, %c0_i32_0 : i32, i32, i32
  }
}

</mosaic_0001>

<llo_original>
// kernel: tpu_custom_call.1
$region0: #{tpu_custom_call.1}
  #allocation0 [shape = 'u32[]', space=smem, size = 0x4, offset = 0x4, fixed_abs, tag = 'smem constant byte address 0x4 - core index']
  #allocation1 [shape = 'u32[144,128]{1,0:T(1,128)}', space=vmem, size = 0x12000, scoped, tag = 'internal scratch']
  %s0 = inlined_call_operand.vmem [shape: f32[256,32], index: 0, kind: input, shape index: {}]
  %s1 = inlined_call_operand.vmem [shape: bf16[32,32], index: 1, kind: input, shape index: {}]
  %s2 = inlined_call_operand.vmem [shape: f32[1,32], index: 2, kind: input, shape index: {}]
  %s3 = inlined_call_operand.vmem [shape: bf16[4,256,8], index: 3, kind: output, shape index: {}]
  %s4 = sld [smem:[#allocation0]]
  $region82: #{tpu_custom_call.1} parent=0
    _
  %s6 = ssub.s32 1, %s4
  %s7 = scalar_select 0, %s6, %s4
  $region1: #{tpu_custom_call.1} parent=0
    #allocation2 [shape = 'u8[262144]{0}', space=vmem, size = 0x40000, scoped, tag = 'output window, operand 0']
    loop: start=0, step=1, limit=4
    $region2: #{tpu_custom_call.1} parent=1 // loop_pre_header
      _
    $region3: #{tpu_custom_call.1} parent=1 // loop_header
      %s9 = sphi 0, %s13
      %p10 = scmp.ge.s32.totalorder %s9, 4
      %s19 = sphi 0, %s21
      %s22 = sphi 0, %s19
      %s23 = sphi 0, %s22
      %s39 = sphi 0, %s23
      %s43 = sphi 0, %s43
      %s45 = sphi 0, %s43
      %s46 = sphi 0, %s45
      %s60 = sphi 0, %s46
      %s64 = sphi 0, %s64
      %s66 = sphi 0, %s64
      %s67 = sphi 0, %s66
      %s81 = sphi 0, %s67
      %s87 = sphi 0, %s89
      %s90 = sphi 0, %s87
      %s91 = sphi 0, %s90
      %s107 = sphi 0, %s91
    $region4: #{tpu_custom_call.1} parent=1 // loop_header_branch
      %12 = sbr.rel (%p10) target = $region8
    $region5: #{tpu_custom_call.1} parent=1 // loop_body
      %s14 = ssub.s32 %s9, 1
      %s15 = ssub.s32 %s9, 2
      %s16 = sadd.s32 %s9, 1
      %s17 = ssub.s32 %s9, %s16
      %p18 = scmp.eq.s32.totalorder %s17, 0
      %s20 = sadd.s32 %s19, 1
      %s21 = scalar_select %p18, %s19, %s20
      %p24 = pneg %p18
      %p25 = scmp.eq.s32.totalorder %s9, 1
      %p26 = por %p24, %p25
      %p27 = scmp.ne.s32.totalorder %s19, %s22
      %p28 = scmp.eq.s32.totalorder %s9, 0
      %p29 = por %p27, %p28
      %p30 = scmp.ne.s32.totalorder %s19, %s22
      %p31 = scmp.eq.s32.totalorder %s14, 1
      %p32 = por %p30, %p31
      %p33 = scmp.ne.s32.totalorder %s22, %s23
      %p34 = scmp.eq.s32.totalorder %s14, 0
      %p35 = por %p33, %p34
      %p36 = scmp.ne.s32.totalorder %s22, %s23
      %p37 = scmp.eq.s32.totalorder %s15, 1
      %p38 = por %p36, %p37
      %p40 = scmp.ne.s32.totalorder %s23, %s39
      %p41 = scmp.eq.s32.totalorder %s15, 0
      %p42 = por %p40, %p41
      %s44 = sadd.s32 %s43, 1
      %p47 = scmp.eq.s32.totalorder %s9, 1
      %p48 = scmp.ne.s32.totalorder %s43, %s45
      %p49 = scmp.eq.s32.totalorder %s9, 0
      %p50 = por %p48, %p49
      %p51 = scmp.ne.s32.totalorder %s43, %s45
      %p52 = scmp.eq.s32.totalorder %s14, 1
      %p53 = por %p51, %p52
      %p54 = scmp.ne.s32.totalorder %s45, %s46
      %p55 = scmp.eq.s32.totalorder %s14, 0
      %p56 = por %p54, %p55
      %p57 = scmp.ne.s32.totalorder %s45, %s46
      %p58 = scmp.eq.s32.totalorder %s15, 1
      %p59 = por %p57, %p58
      %p61 = scmp.ne.s32.totalorder %s46, %s60
      %p62 = scmp.eq.s32.totalorder %s15, 0
      %p63 = por %p61, %p62
      %s65 = sadd.s32 %s64, 1
      %p68 = scmp.eq.s32.totalorder %s9, 1
      %p69 = scmp.ne.s32.totalorder %s64, %s66
      %p70 = scmp.eq.s32.totalorder %s9, 0
      %p71 = por %p69, %p70
      %p72 = scmp.ne.s32.totalorder %s64, %s66
      %p73 = scmp.eq.s32.totalorder %s14, 1
      %p74 = por %p72, %p73
      %p75 = scmp.ne.s32.totalorder %s66, %s67
      %p76 = scmp.eq.s32.totalorder %s14, 0
      %p77 = por %p75, %p76
      %p78 = scmp.ne.s32.totalorder %s66, %s67
      %p79 = scmp.eq.s32.totalorder %s15, 1
      %p80 = por %p78, %p79
      %p82 = scmp.ne.s32.totalorder %s67, %s81
      %p83 = scmp.eq.s32.totalorder %s15, 0
      %p84 = por %p82, %p83
      %s85 = ssub.s32 %s9, %s16
      %p86 = scmp.eq.s32.totalorder %s85, 0
      %s88 = sadd.s32 %s87, 1
      %s89 = scalar_select %p86, %s87, %s88
      %p92 = pneg %p86
      %p93 = scmp.eq.s32.totalorder %s9, 1
      %p94 = por %p92, %p93
      %p95 = scmp.ne.s32.totalorder %s87, %s90
      %p96 = scmp.eq.s32.totalorder %s9, 0
      %p97 = por %p95, %p96
      %p98 = scmp.ne.s32.totalorder %s87, %s90
      %p99 = scmp.eq.s32.totalorder %s14, 1
      %p100 = por %p98, %p99
      %p101 = scmp.ne.s32.totalorder %s90, %s91
      %p102 = scmp.eq.s32.totalorder %s14, 0
      %p103 = por %p101, %p102
      %p104 = scmp.ne.s32.totalorder %s90, %s91
      %p105 = scmp.eq.s32.totalorder %s15, 1
      %p106 = por %p104, %p105
      %p108 = scmp.ne.s32.totalorder %s91, %s107
      %p109 = scmp.eq.s32.totalorder %s15, 0
      %p110 = por %p108, %p109
      %p111 = scmp.le.s32.totalorder 1, %s9
      %p112 = scmp.lt.s32.totalorder %s9, 3
      %p113 = pnand %p111, %p112
      %p114 = pneg %p113
      // Predicated region
      $region9: #{tpu_custom_call.1} parent=5 // pred_check
        _
      $region10: #{tpu_custom_call.1} parent=5 // pred_check_branch
        %116 = sbr.rel (%p113) target = $region12
      $region11: #{tpu_custom_call.1} parent=5 // pred_region
        %s117 = ssub.s32 %s9, 1
        // Predicated region
        $region13: #{tpu_custom_call.1} parent=11 // pred_check
          %p118 = pneg %p56
        $region14: #{tpu_custom_call.1} parent=11 // pred_check_branch
          %120 = sbr.rel (%p118) target = $region16
        $region15: #{tpu_custom_call.1} parent=11 // pred_region
          _
        $region16: #{tpu_custom_call.1} parent=11 // pred_fallthru
          _
        // Predicated region
        $region17: #{tpu_custom_call.1} parent=11 // pred_check
          %p121 = pneg %p77
        $region18: #{tpu_custom_call.1} parent=11 // pred_check_branch
          %123 = sbr.rel (%p121) target = $region20
        $region19: #{tpu_custom_call.1} parent=11 // pred_region
          _
        $region20: #{tpu_custom_call.1} parent=11 // pred_fallthru
          _
      $region12: #{tpu_custom_call.1} parent=5 // pred_fallthru
        _
      %p124 = scmp.lt.s32.totalorder %s9, 2
      // Predicated region
      $region21: #{tpu_custom_call.1} parent=5 // pred_check
        %p125 = pneg %p124
      $region22: #{tpu_custom_call.1} parent=5 // pred_check_branch
        %127 = sbr.rel (%p125) target = $region24
      $region23: #{tpu_custom_call.1} parent=5 // pred_region
        // Predicated region
        $region25: #{tpu_custom_call.1} parent=23 // pred_check
          %p128 = pneg %p29
        $region26: #{tpu_custom_call.1} parent=23 // pred_check_branch
          %130 = sbr.rel (%p128) target = $region28
        $region27: #{tpu_custom_call.1} parent=23 // pred_region
          %s131 = smul.u32 16, %s9
          %p132 = scmp.lt.s32.totalorder %s131, 31
          %s133 = scalar_select %p132, %s131, 31
          %s134 = smul.addr %s133, 8
          %s135 = scalar_lea.vmem %s0, %s134
          %s136 = smul.u32 16, %s9
        $region28: #{tpu_custom_call.1} parent=23 // pred_fallthru
          _
      $region24: #{tpu_custom_call.1} parent=5 // pred_fallthru
        _
      %p137 = scmp.le.s32.totalorder 1, %s9
      %p138 = scmp.lt.s32.totalorder %s9, 3
      %p139 = pnand %p137, %p138
      %p140 = pneg %p139
      // Predicated region
      $region29: #{tpu_custom_call.1} parent=5 // pred_check
        _
      $region30: #{tpu_custom_call.1} parent=5 // pred_check_branch
        %142 = sbr.rel (%p139) target = $region32
      $region31: #{tpu_custom_call.1} parent=5 // pred_region
        %s143 = ssub.s32 %s9, 1
        %s144 = smul.u32 16, %s14
        %p145 = scmp.lt.s32.totalorder %s144, 31
        %s146 = scalar_select %p145, %s144, 31
        %s147 = smul.addr %s146, 8
        %s148 = scalar_lea.vmem %s0, %s147
        %p149 = pneg %p35
        %p150 = pneg %p32
        %p151 = pneg %p56
        %p152 = pneg %p53
        %p153 = pneg %p77
        %p154 = pneg %p74
        %p155 = pneg %p103
        %p156 = pneg %p100
        %s157 = sand.u32 %s90, 1
        %s158 = sand.u32 %s90, 1
        %s159 = smul.addr %s158, 256
        %s160 = scalar_lea.vmem [#allocation2], %s159
        %s161 = smul.u32 16, %s14
        %p162 = scmp.lt.s32.totalorder %s161, 31
        %s163 = scalar_select %p162, %s161, 31
        %s164 = smul.addr %s163, 8
        %s165 = scalar_lea.vmem %s0, %s164
        %s166 = smul.u32 16, %s14
        %s167 = smul.u32 16, %s14
        %v169 = vld [vmem:[%s165] sm:$0xff]
        %v170 = vld [vmem:[%s165 + $0x8] sm:$0xff]
        %v171 = vld [vmem:[%s165 + $0x10] sm:$0xff]
        %v172 = vld [vmem:[%s165 + $0x18] sm:$0xff]
        %v173 = vld [vmem:[%s165 + $0x20] sm:$0xff]
        %v174 = vld [vmem:[%s165 + $0x28] sm:$0xff]
        %v175 = vld [vmem:[%s165 + $0x30] sm:$0xff]
        %v176 = vld [vmem:[%s165 + $0x38] sm:$0xff]
        %v177 = vld [vmem:[%s165 + $0x40] sm:$0xff]
        %v178 = vld [vmem:[%s165 + $0x48] sm:$0xff]
        %v179 = vld [vmem:[%s165 + $0x50] sm:$0xff]
        %v180 = vld [vmem:[%s165 + $0x58] sm:$0xff]
        %v181 = vld [vmem:[%s165 + $0x60] sm:$0xff]
        %v182 = vld [vmem:[%s165 + $0x68] sm:$0xff]
        %v183 = vld [vmem:[%s165 + $0x70] sm:$0xff]
        %v184 = vld [vmem:[%s165 + $0x78] sm:$0xff]
        %vm185 = vcmask 261120
        %v186 = vsel %vm185, %v169, 0.0
        %187 = vadd.xlane.f32.xlu0 %v186
        %v188 = vpop.xlane.xlu0 %187
        %v189 = vsel %vm185, %v170, 0.0
        %190 = vadd.xlane.f32.xlu0 %v189
        %v191 = vpop.xlane.xlu0 %190
        %v192 = vsel %vm185, %v171, 0.0
        %193 = vadd.xlane.f32.xlu0 %v192
        %v194 = vpop.xlane.xlu0 %193
        %v195 = vsel %vm185, %v172, 0.0
        %196 = vadd.xlane.f32.xlu0 %v195
        %v197 = vpop.xlane.xlu0 %196
        %v198 = vsel %vm185, %v173, 0.0
        %199 = vadd.xlane.f32.xlu0 %v198
        %v200 = vpop.xlane.xlu0 %199
        %v201 = vsel %vm185, %v174, 0.0
        %202 = vadd.xlane.f32.xlu0 %v201
        %v203 = vpop.xlane.xlu0 %202
        %v204 = vsel %vm185, %v175, 0.0
        %205 = vadd.xlane.f32.xlu0 %v204
        %v206 = vpop.xlane.xlu0 %205
        %v207 = vsel %vm185, %v176, 0.0
        %208 = vadd.xlane.f32.xlu0 %v207
        %v209 = vpop.xlane.xlu0 %208
        %v210 = vsel %vm185, %v177, 0.0
        %211 = vadd.xlane.f32.xlu0 %v210
        %v212 = vpop.xlane.xlu0 %211
        %v213 = vsel %vm185, %v178, 0.0
        %214 = vadd.xlane.f32.xlu0 %v213
        %v215 = vpop.xlane.xlu0 %214
        %v216 = vsel %vm185, %v179, 0.0
        %217 = vadd.xlane.f32.xlu0 %v216
        %v218 = vpop.xlane.xlu0 %217
        %v219 = vsel %vm185, %v180, 0.0
        %220 = vadd.xlane.f32.xlu0 %v219
        %v221 = vpop.xlane.xlu0 %220
        %v222 = vsel %vm185, %v181, 0.0
        %223 = vadd.xlane.f32.xlu0 %v222
        %v224 = vpop.xlane.xlu0 %223
        %v225 = vsel %vm185, %v182, 0.0
        %226 = vadd.xlane.f32.xlu0 %v225
        %v227 = vpop.xlane.xlu0 %226
        %v228 = vsel %vm185, %v183, 0.0
        %229 = vadd.xlane.f32.xlu0 %v228
        %v230 = vpop.xlane.xlu0 %229
        %v231 = vsel %vm185, %v184, 0.0
        %232 = vadd.xlane.f32.xlu0 %v231
        %v233 = vpop.xlane.xlu0 %232
        %v234 = vrcp.pop 32.0
        %v235 = vmul.f32 %v188, %v234
        %v236 = vmul.f32 %v191, %v234
        %v237 = vmul.f32 %v194, %v234
        %v238 = vmul.f32 %v197, %v234
        %v239 = vmul.f32 %v200, %v234
        %v240 = vmul.f32 %v203, %v234
        %v241 = vmul.f32 %v206, %v234
        %v242 = vmul.f32 %v209, %v234
        %v243 = vmul.f32 %v212, %v234
        %v244 = vmul.f32 %v215, %v234
        %v245 = vmul.f32 %v218, %v234
        %v246 = vmul.f32 %v221, %v234
        %v247 = vmul.f32 %v224, %v234
        %v248 = vmul.f32 %v227, %v234
        %v249 = vmul.f32 %v230, %v234
        %v250 = vmul.f32 %v233, %v234
        %v251 = vsub.f32 %v169, %v235
        %v252 = vsub.f32 %v170, %v236
        %v253 = vsub.f32 %v171, %v237
        %v254 = vsub.f32 %v172, %v238
        %v255 = vsub.f32 %v173, %v239
        %v256 = vsub.f32 %v174, %v240
        %v257 = vsub.f32 %v175, %v241
        %v258 = vsub.f32 %v176, %v242
        %v259 = vsub.f32 %v177, %v243
        %v260 = vsub.f32 %v178, %v244
        %v261 = vsub.f32 %v179, %v245
        %v262 = vsub.f32 %v180, %v246
        %v263 = vsub.f32 %v181, %v247
        %v264 = vsub.f32 %v182, %v248
        %v265 = vsub.f32 %v183, %v249
        %v266 = vsub.f32 %v184, %v250
        %v267 = vmul.f32 %v251, %v251
        %v268 = vmul.f32 %v252, %v252
        %v269 = vmul.f32 %v253, %v253
        %v270 = vmul.f32 %v254, %v254
        %v271 = vmul.f32 %v255, %v255
        %v272 = vmul.f32 %v256, %v256
        %v273 = vmul.f32 %v257, %v257
        %v274 = vmul.f32 %v258, %v258
        %v275 = vmul.f32 %v259, %v259
        %v276 = vmul.f32 %v260, %v260
        %v277 = vmul.f32 %v261, %v261
        %v278 = vmul.f32 %v262, %v262
        %v279 = vmul.f32 %v263, %v263
        %v280 = vmul.f32 %v264, %v264
        %v281 = vmul.f32 %v265, %v265
        %v282 = vmul.f32 %v266, %v266
        %v283 = vsel %vm185, %v267, 0.0
        %284 = vadd.xlane.f32.xlu0 %v283
        %v285 = vpop.xlane.xlu0 %284
        %v286 = vsel %vm185, %v268, 0.0
        %287 = vadd.xlane.f32.xlu0 %v286
        %v288 = vpop.xlane.xlu0 %287
        %v289 = vsel %vm185, %v269, 0.0
        %290 = vadd.xlane.f32.xlu0 %v289
        %v291 = vpop.xlane.xlu0 %290
        %v292 = vsel %vm185, %v270, 0.0
        %293 = vadd.xlane.f32.xlu0 %v292
        %v294 = vpop.xlane.xlu0 %293
        %v295 = vsel %vm185, %v271, 0.0
        %296 = vadd.xlane.f32.xlu0 %v295
        %v297 = vpop.xlane.xlu0 %296
        %v298 = vsel %vm185, %v272, 0.0
        %299 = vadd.xlane.f32.xlu0 %v298
        %v300 = vpop.xlane.xlu0 %299
        %v301 = vsel %vm185, %v273, 0.0
        %302 = vadd.xlane.f32.xlu0 %v301
        %v303 = vpop.xlane.xlu0 %302
        %v304 = vsel %vm185, %v274, 0.0
        %305 = vadd.xlane.f32.xlu0 %v304
        %v306 = vpop.xlane.xlu0 %305
        %v307 = vsel %vm185, %v275, 0.0
        %308 = vadd.xlane.f32.xlu0 %v307
        %v309 = vpop.xlane.xlu0 %308
        %v310 = vsel %vm185, %v276, 0.0
        %311 = vadd.xlane.f32.xlu0 %v310
        %v312 = vpop.xlane.xlu0 %311
        %v313 = vsel %vm185, %v277, 0.0
        %314 = vadd.xlane.f32.xlu0 %v313
        %v315 = vpop.xlane.xlu0 %314
        %v316 = vsel %vm185, %v278, 0.0
        %317 = vadd.xlane.f32.xlu0 %v316
        %v318 = vpop.xlane.xlu0 %317
        %v319 = vsel %vm185, %v279, 0.0
        %320 = vadd.xlane.f32.xlu0 %v319
        %v321 = vpop.xlane.xlu0 %320
        %v322 = vsel %vm185, %v280, 0.0
        %323 = vadd.xlane.f32.xlu0 %v322
        %v324 = vpop.xlane.xlu0 %323
        %v325 = vsel %vm185, %v281, 0.0
        %326 = vadd.xlane.f32.xlu0 %v325
        %v327 = vpop.xlane.xlu0 %326
        %v328 = vsel %vm185, %v282, 0.0
        %329 = vadd.xlane.f32.xlu0 %v328
        %v330 = vpop.xlane.xlu0 %329
        %v331 = vmul.f32 %v285, %v234
        %v332 = vmul.f32 %v288, %v234
        %v333 = vmul.f32 %v291, %v234
        %v334 = vmul.f32 %v294, %v234
        %v335 = vmul.f32 %v297, %v234
        %v336 = vmul.f32 %v300, %v234
        %v337 = vmul.f32 %v303, %v234
        %v338 = vmul.f32 %v306, %v234
        %v339 = vmul.f32 %v309, %v234
        %v340 = vmul.f32 %v312, %v234
        %v341 = vmul.f32 %v315, %v234
        %v342 = vmul.f32 %v318, %v234
        %v343 = vmul.f32 %v321, %v234
        %v344 = vmul.f32 %v324, %v234
        %v345 = vmul.f32 %v327, %v234
        %v346 = vmul.f32 %v330, %v234
        %v347 = vadd.f32 %v331, 1e-05
        %v348 = vadd.f32 %v332, 1e-05
        %v349 = vadd.f32 %v333, 1e-05
        %v350 = vadd.f32 %v334, 1e-05
        %v351 = vadd.f32 %v335, 1e-05
        %v352 = vadd.f32 %v336, 1e-05
        %v353 = vadd.f32 %v337, 1e-05
        %v354 = vadd.f32 %v338, 1e-05
        %v355 = vadd.f32 %v339, 1e-05
        %v356 = vadd.f32 %v340, 1e-05
        %v357 = vadd.f32 %v341, 1e-05
        %v358 = vadd.f32 %v342, 1e-05
        %v359 = vadd.f32 %v343, 1e-05
        %v360 = vadd.f32 %v344, 1e-05
        %v361 = vadd.f32 %v345, 1e-05
        %v362 = vadd.f32 %v346, 1e-05
        %v363 = vrsqrt.pop %v347
        %v364 = vrsqrt.pop %v348
        %v365 = vrsqrt.pop %v349
        %v366 = vrsqrt.pop %v350
        %v367 = vrsqrt.pop %v351
        %v368 = vrsqrt.pop %v352
        %v369 = vrsqrt.pop %v353
        %v370 = vrsqrt.pop %v354
        %v371 = vrsqrt.pop %v355
        %v372 = vrsqrt.pop %v356
        %v373 = vrsqrt.pop %v357
        %v374 = vrsqrt.pop %v358
        %v375 = vrsqrt.pop %v359
        %v376 = vrsqrt.pop %v360
        %v377 = vrsqrt.pop %v361
        %v378 = vrsqrt.pop %v362
        %v379 = vmul.f32 %v251, %v363
        %v380 = vmul.f32 %v252, %v364
        %v381 = vmul.f32 %v253, %v365
        %v382 = vmul.f32 %v254, %v366
        %v383 = vmul.f32 %v255, %v367
        %v384 = vmul.f32 %v256, %v368
        %v385 = vmul.f32 %v257, %v369
        %v386 = vmul.f32 %v258, %v370
        %v387 = vmul.f32 %v259, %v371
        %v388 = vmul.f32 %v260, %v372
        %v389 = vmul.f32 %v261, %v373
        %v390 = vmul.f32 %v262, %v374
        %v391 = vmul.f32 %v263, %v375
        %v392 = vmul.f32 %v264, %v376
        %v393 = vmul.f32 %v265, %v377
        %v394 = vmul.f32 %v266, %v378
        %v395 = vpack.c.bf16 %v380, %v379
        %v396 = vpack.c.bf16 %v382, %v381
        %v397 = vpack.c.bf16 %v384, %v383
        %v398 = vpack.c.bf16 %v386, %v385
        %v399 = vpack.c.bf16 %v388, %v387
        %v400 = vpack.c.bf16 %v390, %v389
        %v401 = vpack.c.bf16 %v392, %v391
        %v402 = vpack.c.bf16 %v394, %v393
        %v403 = vld [vmem:[%s1] sm:$0xf]
        %v404 = vld [vmem:[%s1 + $0x4] sm:$0xf]
        %v405 = vld [vmem:[%s1 + $0x8] sm:$0xf]
        %v406 = vld [vmem:[%s1 + $0xc] sm:$0xf]
        %v407 = vld [vmem:[%s2] sm:$0x1]
        %v409 = vlaneseq
        %v410 = vshrl.u32 %v409, 7
        %v411 = vsub.s32 0, %v410
        %v412 = vrot.slane %v407, %v411
        %v418 = vunpack.c.l.b16 %v403
        %v419 = vunpack.c.l.b16 %v404
        %v420 = vunpack.c.l.b16 %v405
        %v421 = vunpack.c.l.b16 %v406
        %v422 = vpack.c.b16 %v419, %v418
        %v423 = vpack.c.b16 %v421, %v420
        %v427 = vsel %vm185, %v395, 0
        %v430 = vsel %vm185, %v396, 0
        %v433 = vsel %vm185, %v397, 0
        %v436 = vsel %vm185, %v398, 0
        %v439 = vsel %vm185, %v399, 0
        %v442 = vsel %vm185, %v400, 0
        %v445 = vsel %vm185, %v401, 0
        %v448 = vsel %vm185, %v402, 0
        %450 = vmatprep.subr.bf16.mxu0 0
        %451 = vmatpush1.bf16.msra.mxu0 %v422
        %452 = vmatprep.subr.bf16.mxu0 0
        %453 = vmatpush1.bf16.msra.mxu0 %v423
        %454 = vmatprep.subr.bf16.mxu0 0
        %455 = vmatpush1.bf16.msra.mxu0 0
        %456 = vmatprep.subr.bf16.mxu0 0
        %457 = vmatpush1.bf16.msra.mxu0 0
        %458 = vmatprep.subr.bf16.mxu0 0
        %459 = vmatpush1.bf16.msra.mxu0 0
        %460 = vmatprep.subr.bf16.mxu0 0
        %461 = vmatpush1.bf16.msra.mxu0 0
        %462 = vmatprep.subr.bf16.mxu0 0
        %463 = vmatpush1.bf16.msra.mxu0 0
        %464 = vmatprep.subr.bf16.mxu0 0
        %465 = vmatpush1.bf16.msra.mxu0 0
        %466 = vmatprep.subr.bf16.mxu0 0
        %467 = vmatpush1.bf16.msra.mxu0 0
        %468 = vmatprep.subr.bf16.mxu0 0
        %469 = vmatpush1.bf16.msra.mxu0 0
        %470 = vmatprep.subr.bf16.mxu0 0
        %471 = vmatpush1.bf16.msra.mxu0 0
        %472 = vmatprep.subr.bf16.mxu0 0
        %473 = vmatpush1.bf16.msra.mxu0 0
        %474 = vmatprep.subr.bf16.mxu0 0
        %475 = vmatpush1.bf16.msra.mxu0 0
        %476 = vmatprep.subr.bf16.mxu0 0
        %477 = vmatpush1.bf16.msra.mxu0 0
        %478 = vmatprep.subr.bf16.mxu0 0
        %479 = vmatpush1.bf16.msra.mxu0 0
        %480 = vmatprep.subr.bf16.mxu0 0
        %481 = vmatpush1.bf16.msra.mxu0 0
        %482 = vmatprep.mubr.bf16.mxu0 0
        %483 = vmatmul.mubr.bf16.gmra.mrb[0].mxu0 %v427
        %v484 = vpop.f32.mrb[0].mxu0
        %v485 = vadd.f32 %v412, %v484
        %v486 = vpop.f32.mrb[0].mxu0
        %v487 = vpop.f32.mrb[0].mxu0
        %v488 = vadd.f32 %v412, %v487
        %v489 = vpop.f32.mrb[0].mxu0
        %490 = vmatprep.mubr.bf16.mxu0 0
        %491 = vmatmul.mubr.bf16.gmra.mrb[0].mxu0 %v430
        %v492 = vpop.f32.mrb[0].mxu0
        %v493 = vadd.f32 %v412, %v492
        %v494 = vpop.f32.mrb[0].mxu0
        %v495 = vpop.f32.mrb[0].mxu0
        %v496 = vadd.f32 %v412, %v495
        %v497 = vpop.f32.mrb[0].mxu0
        %498 = vmatprep.mubr.bf16.mxu0 0
        %499 = vmatmul.mubr.bf16.gmra.mrb[0].mxu0 %v433
        %v500 = vpop.f32.mrb[0].mxu0
        %v501 = vadd.f32 %v412, %v500
        %v502 = vpop.f32.mrb[0].mxu0
        %v503 = vpop.f32.mrb[0].mxu0
        %v504 = vadd.f32 %v412, %v503
        %v505 = vpop.f32.mrb[0].mxu0
        %506 = vmatprep.mubr.bf16.mxu0 0
        %507 = vmatmul.mubr.bf16.gmra.mrb[0].mxu0 %v436
        %v508 = vpop.f32.mrb[0].mxu0
        %v509 = vadd.f32 %v412, %v508
        %v510 = vpop.f32.mrb[0].mxu0
        %v511 = vpop.f32.mrb[0].mxu0
        %v512 = vadd.f32 %v412, %v511
        %v513 = vpop.f32.mrb[0].mxu0
        %514 = vmatprep.mubr.bf16.mxu0 0
        %515 = vmatmul.mubr.bf16.gmra.mrb[0].mxu0 %v439
        %v516 = vpop.f32.mrb[0].mxu0
        %v517 = vadd.f32 %v412, %v516
        %v518 = vpop.f32.mrb[0].mxu0
        %v519 = vpop.f32.mrb[0].mxu0
        %v520 = vadd.f32 %v412, %v519
        %v521 = vpop.f32.mrb[0].mxu0
        %522 = vmatprep.mubr.bf16.mxu0 0
        %523 = vmatmul.mubr.bf16.gmra.mrb[0].mxu0 %v442
        %v524 = vpop.f32.mrb[0].mxu0
        %v525 = vadd.f32 %v412, %v524
        %v526 = vpop.f32.mrb[0].mxu0
        %v527 = vpop.f32.mrb[0].mxu0
        %v528 = vadd.f32 %v412, %v527
        %v529 = vpop.f32.mrb[0].mxu0
        %530 = vmatprep.mubr.bf16.mxu0 0
        %531 = vmatmul.mubr.bf16.gmra.mrb[0].mxu0 %v445
        %v532 = vpop.f32.mrb[0].mxu0
        %v533 = vadd.f32 %v412, %v532
        %v534 = vpop.f32.mrb[0].mxu0
        %v535 = vpop.f32.mrb[0].mxu0
        %v536 = vadd.f32 %v412, %v535
        %v537 = vpop.f32.mrb[0].mxu0
        %538 = vmatprep.mubr.bf16.mxu0 0
        %539 = vmatmul.mubr.bf16.gmra.mrb[0].mxu0 %v448
        %v540 = vpop.f32.mrb[0].mxu0
        %v541 = vadd.f32 %v412, %v540
        %v542 = vpop.f32.mrb[0].mxu0
        %v543 = vpop.f32.mrb[0].mxu0
        %v544 = vadd.f32 %v412, %v543
        %v545 = vpop.f32.mrb[0].mxu0
        %546 = vdwg.mxu0
        %v547 = vpack.c.bf16 %v488, %v485
        %v548 = vpack.c.bf16 %v496, %v493
        %v549 = vpack.c.bf16 %v504, %v501
        %v550 = vpack.c.bf16 %v512, %v509
        %v551 = vpack.c.bf16 %v520, %v517
        %v552 = vpack.c.bf16 %v528, %v525
        %v553 = vpack.c.bf16 %v536, %v533
        %v554 = vpack.c.bf16 %v544, %v541
        %v563 = vunpack.c.l.b16 %v547
        %v564 = vunpack.c.h.b16 %v547
        %v565 = vunpack.c.l.b16 %v548
        %v566 = vunpack.c.h.b16 %v548
        %v567 = vunpack.c.l.b16 %v549
        %v568 = vunpack.c.h.b16 %v549
        %v569 = vunpack.c.l.b16 %v550
        %v570 = vunpack.c.h.b16 %v550
        %v571 = vunpack.c.l.b16 %v551
        %v572 = vunpack.c.h.b16 %v551
        %v573 = vunpack.c.l.b16 %v552
        %v574 = vunpack.c.h.b16 %v552
        %v575 = vunpack.c.l.b16 %v553
        %v576 = vunpack.c.h.b16 %v553
        %v577 = vunpack.c.l.b16 %v554
        %v578 = vunpack.c.h.b16 %v554
        %v579 = vpack.c.b16 %v563, %v563
        %v580 = vpack.c.b16 %v564, %v564
        %v581 = vpack.c.b16 %v565, %v565
        %v582 = vpack.c.b16 %v566, %v566
        %v583 = vpack.c.b16 %v567, %v567
        %v584 = vpack.c.b16 %v568, %v568
        %v585 = vpack.c.b16 %v569, %v569
        %v586 = vpack.c.b16 %v570, %v570
        %v587 = vpack.c.b16 %v571, %v571
        %v588 = vpack.c.b16 %v572, %v572
        %v589 = vpack.c.b16 %v573, %v573
        %v590 = vpack.c.b16 %v574, %v574
        %v591 = vpack.c.b16 %v575, %v575
        %v592 = vpack.c.b16 %v576, %v576
        %v593 = vpack.c.b16 %v577, %v577
        %v594 = vpack.c.b16 %v578, %v578
        %vm611 = vcmask 60416
        %612 = vst.msk [vmem:[%s160] sm:$0xf] %vm611, %v579
        %613 = vst.msk [vmem:[%s160 + $0x4] sm:$0xf] %vm611, %v580
        %614 = vst.msk [vmem:[%s160 + $0x8] sm:$0xf] %vm611, %v581
        %615 = vst.msk [vmem:[%s160 + $0xc] sm:$0xf] %vm611, %v582
        %616 = vst.msk [vmem:[%s160 + $0x10] sm:$0xf] %vm611, %v583
        %617 = vst.msk [vmem:[%s160 + $0x14] sm:$0xf] %vm611, %v584
        %618 = vst.msk [vmem:[%s160 + $0x18] sm:$0xf] %vm611, %v585
        %619 = vst.msk [vmem:[%s160 + $0x1c] sm:$0xf] %vm611, %v586
        %620 = vst.msk [vmem:[%s160 + $0x20] sm:$0xf] %vm611, %v587
        %621 = vst.msk [vmem:[%s160 + $0x24] sm:$0xf] %vm611, %v588
        %622 = vst.msk [vmem:[%s160 + $0x28] sm:$0xf] %vm611, %v589
        %623 = vst.msk [vmem:[%s160 + $0x2c] sm:$0xf] %vm611, %v590
        %624 = vst.msk [vmem:[%s160 + $0x30] sm:$0xf] %vm611, %v591
        %625 = vst.msk [vmem:[%s160 + $0x34] sm:$0xf] %vm611, %v592
        %626 = vst.msk [vmem:[%s160 + $0x38] sm:$0xf] %vm611, %v593
        %627 = vst.msk [vmem:[%s160 + $0x3c] sm:$0xf] %vm611, %v594
        %628 = vrot.lane.b32.xlu0 %v579, 120
        %v629 = vpop.permute.xlu0 %628
        %630 = vrot.lane.b32.xlu0 %v580, 120
        %v631 = vpop.permute.xlu0 %630
        %632 = vrot.lane.b32.xlu0 %v581, 120
        %v633 = vpop.permute.xlu0 %632
        %634 = vrot.lane.b32.xlu0 %v582, 120
        %v635 = vpop.permute.xlu0 %634
        %636 = vrot.lane.b32.xlu0 %v583, 120
        %v637 = vpop.permute.xlu0 %636
        %638 = vrot.lane.b32.xlu0 %v584, 120
        %v639 = vpop.permute.xlu0 %638
        %640 = vrot.lane.b32.xlu0 %v585, 120
        %v641 = vpop.permute.xlu0 %640
        %642 = vrot.lane.b32.xlu0 %v586, 120
        %v643 = vpop.permute.xlu0 %642
        %644 = vrot.lane.b32.xlu0 %v587, 120
        %v645 = vpop.permute.xlu0 %644
        %646 = vrot.lane.b32.xlu0 %v588, 120
        %v647 = vpop.permute.xlu0 %646
        %648 = vrot.lane.b32.xlu0 %v589, 120
        %v649 = vpop.permute.xlu0 %648
        %650 = vrot.lane.b32.xlu0 %v590, 120
        %v651 = vpop.permute.xlu0 %650
        %652 = vrot.lane.b32.xlu0 %v591, 120
        %v653 = vpop.permute.xlu0 %652
        %654 = vrot.lane.b32.xlu0 %v592, 120
        %v655 = vpop.permute.xlu0 %654
        %656 = vrot.lane.b32.xlu0 %v593, 120
        %v657 = vpop.permute.xlu0 %656
        %658 = vrot.lane.b32.xlu0 %v594, 120
        %v659 = vpop.permute.xlu0 %658
        %s676 = scalar_lea.vmem %s160, 64 [#allocation2]
        %677 = vst.msk [vmem:[%s676] sm:$0xf] %vm611, %v629
        %678 = vst.msk [vmem:[%s676 + $0x4] sm:$0xf] %vm611, %v631
        %679 = vst.msk [vmem:[%s676 + $0x8] sm:$0xf] %vm611, %v633
        %680 = vst.msk [vmem:[%s676 + $0xc] sm:$0xf] %vm611, %v635
        %681 = vst.msk [vmem:[%s676 + $0x10] sm:$0xf] %vm611, %v637
        %682 = vst.msk [vmem:[%s676 + $0x14] sm:$0xf] %vm611, %v639
        %683 = vst.msk [vmem:[%s676 + $0x18] sm:$0xf] %vm611, %v641
        %684 = vst.msk [vmem:[%s676 + $0x1c] sm:$0xf] %vm611, %v643
        %685 = vst.msk [vmem:[%s676 + $0x20] sm:$0xf] %vm611, %v645
        %686 = vst.msk [vmem:[%s676 + $0x24] sm:$0xf] %vm611, %v647
        %687 = vst.msk [vmem:[%s676 + $0x28] sm:$0xf] %vm611, %v649
        %688 = vst.msk [vmem:[%s676 + $0x2c] sm:$0xf] %vm611, %v651
        %689 = vst.msk [vmem:[%s676 + $0x30] sm:$0xf] %vm611, %v653
        %690 = vst.msk [vmem:[%s676 + $0x34] sm:$0xf] %vm611, %v655
        %691 = vst.msk [vmem:[%s676 + $0x38] sm:$0xf] %vm611, %v657
        %692 = vst.msk [vmem:[%s676 + $0x3c] sm:$0xf] %vm611, %v659
        %693 = vrot.lane.b32.xlu0 %v579, 112
        %v694 = vpop.permute.xlu0 %693
        %695 = vrot.lane.b32.xlu0 %v580, 112
        %v696 = vpop.permute.xlu0 %695
        %697 = vrot.lane.b32.xlu0 %v581, 112
        %v698 = vpop.permute.xlu0 %697
        %699 = vrot.lane.b32.xlu0 %v582, 112
        %v700 = vpop.permute.xlu0 %699
        %701 = vrot.lane.b32.xlu0 %v583, 112
        %v702 = vpop.permute.xlu0 %701
        %703 = vrot.lane.b32.xlu0 %v584, 112
        %v704 = vpop.permute.xlu0 %703
        %705 = vrot.lane.b32.xlu0 %v585, 112
        %v706 = vpop.permute.xlu0 %705
        %707 = vrot.lane.b32.xlu0 %v586, 112
        %v708 = vpop.permute.xlu0 %707
        %709 = vrot.lane.b32.xlu0 %v587, 112
        %v710 = vpop.permute.xlu0 %709
        %711 = vrot.lane.b32.xlu0 %v588, 112
        %v712 = vpop.permute.xlu0 %711
        %713 = vrot.lane.b32.xlu0 %v589, 112
        %v714 = vpop.permute.xlu0 %713
        %715 = vrot.lane.b32.xlu0 %v590, 112
        %v716 = vpop.permute.xlu0 %715
        %717 = vrot.lane.b32.xlu0 %v591, 112
        %v718 = vpop.permute.xlu0 %717
        %719 = vrot.lane.b32.xlu0 %v592, 112
        %v720 = vpop.permute.xlu0 %719
        %721 = vrot.lane.b32.xlu0 %v593, 112
        %v722 = vpop.permute.xlu0 %721
        %723 = vrot.lane.b32.xlu0 %v594, 112
        %v724 = vpop.permute.xlu0 %723
        %s741 = scalar_lea.vmem %s160, 128 [#allocation2]
        %742 = vst.msk [vmem:[%s741] sm:$0xf] %vm611, %v694
        %743 = vst.msk [vmem:[%s741 + $0x4] sm:$0xf] %vm611, %v696
        %744 = vst.msk [vmem:[%s741 + $0x8] sm:$0xf] %vm611, %v698
        %745 = vst.msk [vmem:[%s741 + $0xc] sm:$0xf] %vm611, %v700
        %746 = vst.msk [vmem:[%s741 + $0x10] sm:$0xf] %vm611, %v702
        %747 = vst.msk [vmem:[%s741 + $0x14] sm:$0xf] %vm611, %v704
        %748 = vst.msk [vmem:[%s741 + $0x18] sm:$0xf] %vm611, %v706
        %749 = vst.msk [vmem:[%s741 + $0x1c] sm:$0xf] %vm611, %v708
        %750 = vst.msk [vmem:[%s741 + $0x20] sm:$0xf] %vm611, %v710
        %751 = vst.msk [vmem:[%s741 + $0x24] sm:$0xf] %vm611, %v712
        %752 = vst.msk [vmem:[%s741 + $0x28] sm:$0xf] %vm611, %v714
        %753 = vst.msk [vmem:[%s741 + $0x2c] sm:$0xf] %vm611, %v716
        %754 = vst.msk [vmem:[%s741 + $0x30] sm:$0xf] %vm611, %v718
        %755 = vst.msk [vmem:[%s741 + $0x34] sm:$0xf] %vm611, %v720
        %756 = vst.msk [vmem:[%s741 + $0x38] sm:$0xf] %vm611, %v722
        %757 = vst.msk [vmem:[%s741 + $0x3c] sm:$0xf] %vm611, %v724
        %758 = vrot.lane.b32.xlu0 %v579, 104
        %v759 = vpop.permute.xlu0 %758
        %760 = vrot.lane.b32.xlu0 %v580, 104
        %v761 = vpop.permute.xlu0 %760
        %762 = vrot.lane.b32.xlu0 %v581, 104
        %v763 = vpop.permute.xlu0 %762
        %764 = vrot.lane.b32.xlu0 %v582, 104
        %v765 = vpop.permute.xlu0 %764
        %766 = vrot.lane.b32.xlu0 %v583, 104
        %v767 = vpop.permute.xlu0 %766
        %768 = vrot.lane.b32.xlu0 %v584, 104
        %v769 = vpop.permute.xlu0 %768
        %770 = vrot.lane.b32.xlu0 %v585, 104
        %v771 = vpop.permute.xlu0 %770
        %772 = vrot.lane.b32.xlu0 %v586, 104
        %v773 = vpop.permute.xlu0 %772
        %774 = vrot.lane.b32.xlu0 %v587, 104
        %v775 = vpop.permute.xlu0 %774
        %776 = vrot.lane.b32.xlu0 %v588, 104
        %v777 = vpop.permute.xlu0 %776
        %778 = vrot.lane.b32.xlu0 %v589, 104
        %v779 = vpop.permute.xlu0 %778
        %780 = vrot.lane.b32.xlu0 %v590, 104
        %v781 = vpop.permute.xlu0 %780
        %782 = vrot.lane.b32.xlu0 %v591, 104
        %v783 = vpop.permute.xlu0 %782
        %784 = vrot.lane.b32.xlu0 %v592, 104
        %v785 = vpop.permute.xlu0 %784
        %786 = vrot.lane.b32.xlu0 %v593, 104
        %v787 = vpop.permute.xlu0 %786
        %788 = vrot.lane.b32.xlu0 %v594, 104
        %v789 = vpop.permute.xlu0 %788
        %s806 = scalar_lea.vmem %s160, 192 [#allocation2]
        %807 = vst.msk [vmem:[%s806] sm:$0xf] %vm611, %v759
        %808 = vst.msk [vmem:[%s806 + $0x4] sm:$0xf] %vm611, %v761
        %809 = vst.msk [vmem:[%s806 + $0x8] sm:$0xf] %vm611, %v763
        %810 = vst.msk [vmem:[%s806 + $0xc] sm:$0xf] %vm611, %v765
        %811 = vst.msk [vmem:[%s806 + $0x10] sm:$0xf] %vm611, %v767
        %812 = vst.msk [vmem:[%s806 + $0x14] sm:$0xf] %vm611, %v769
        %813 = vst.msk [vmem:[%s806 + $0x18] sm:$0xf] %vm611, %v771
        %814 = vst.msk [vmem:[%s806 + $0x1c] sm:$0xf] %vm611, %v773
        %815 = vst.msk [vmem:[%s806 + $0x20] sm:$0xf] %vm611, %v775
        %816 = vst.msk [vmem:[%s806 + $0x24] sm:$0xf] %vm611, %v777
        %817 = vst.msk [vmem:[%s806 + $0x28] sm:$0xf] %vm611, %v779
        %818 = vst.msk [vmem:[%s806 + $0x2c] sm:$0xf] %vm611, %v781
        %819 = vst.msk [vmem:[%s806 + $0x30] sm:$0xf] %vm611, %v783
        %820 = vst.msk [vmem:[%s806 + $0x34] sm:$0xf] %vm611, %v785
        %821 = vst.msk [vmem:[%s806 + $0x38] sm:$0xf] %vm611, %v787
        %822 = vst.msk [vmem:[%s806 + $0x3c] sm:$0xf] %vm611, %v789
        %s823 = sand.u32 %s90, 1
        %s824 = sand.u32 %s90, 1
        %s825 = smul.addr %s824, 256
        %s826 = scalar_lea.vmem [#allocation2], %s825
        // Predicated region
        $region33: #{tpu_custom_call.1} parent=31 // pred_check
          %p827 = pneg %p100
        $region34: #{tpu_custom_call.1} parent=31 // pred_check_branch
          %829 = sbr.rel (%p827) target = $region36
        $region35: #{tpu_custom_call.1} parent=31 // pred_region
          %s830 = smul.u32 16, %s14
          %s831 = smul.addr %s830, 4
          %s832 = scalar_lea.vmem %s3, %s831
          // Predicated region
          $region37: #{tpu_custom_call.1} parent=35 // pred_check
            _
          $region38: #{tpu_custom_call.1} parent=35 // pred_check_branch
            %834 = sbr.rel (0) target = $region40
          $region39: #{tpu_custom_call.1} parent=35 // pred_region
            // Predicated region
            $region41: #{tpu_custom_call.1} parent=39 // pred_check
              _
            $region42: #{tpu_custom_call.1} parent=39 // pred_check_branch
              %836 = sbr.rel target = $region44
            $region43: #{tpu_custom_call.1} parent=39 // pred_region
              // Predicated region
              $region56: #{tpu_custom_call.1} parent=43 // pred_check
                _
              $region57: #{tpu_custom_call.1} parent=43 // pred_check_branch
                %977 = sbr.rel (0) target = $region59
              $region58: #{tpu_custom_call.1} parent=43 // pred_region
                loop: start=0, step=1, limit=1
                $region60: #{tpu_custom_call.1} parent=58 // loop_pre_header
                  _
                $region61: #{tpu_custom_call.1} parent=58 // loop_header
                  %s979 = sphi 0, %s983
                  %p980 = scmp.ge.s32.totalorder %s979, 1
                  %s984 = sphi %s826, %s826
                  %s985 = sphi %s832, %s832
                $region62: #{tpu_custom_call.1} parent=58 // loop_header_branch
                  %982 = sbr.rel (%p980) target = $region66
                $region63: #{tpu_custom_call.1} parent=58 // loop_body
                  _
                $region64: #{tpu_custom_call.1} parent=58 // loop_footer
                  %s983 = sadd.s32 1, %s979
                $region65: #{tpu_custom_call.1} parent=58 // loop_footer_branch
                  %978 = sbr.rel target = $region61
                $region66: #{tpu_custom_call.1} parent=58 // loop_exit
                  _
                loop: start=0, step=1, limit=1
                $region67: #{tpu_custom_call.1} parent=58 // loop_pre_header
                  _
                $region68: #{tpu_custom_call.1} parent=58 // loop_header
                  %s988 = sphi 0, %s992
                  %p989 = scmp.ge.s32.totalorder %s988, 1
                  %s993 = sphi %s826, %s826
                  %s994 = sphi %s832, %s832
                $region69: #{tpu_custom_call.1} parent=58 // loop_header_branch
                  %991 = sbr.rel (%p989) target = $region73
                $region70: #{tpu_custom_call.1} parent=58 // loop_body
                  %v995 = vld [vmem:[%s993] sm:$0xf]
                  %996 = vst [vmem:[%s994] sm:$0xf] %v995
                  %v997 = vld [vmem:[%s993 + $0x4] sm:$0xf]
                  %998 = vst [vmem:[%s994 + $0x4] sm:$0xf] %v997
                  %v999 = vld [vmem:[%s993 + $0x8] sm:$0xf]
                  %1000 = vst [vmem:[%s994 + $0x8] sm:$0xf] %v999
                  %v1001 = vld [vmem:[%s993 + $0xc] sm:$0xf]
                  %1002 = vst [vmem:[%s994 + $0xc] sm:$0xf] %v1001
                  %v1003 = vld [vmem:[%s993 + $0x10] sm:$0xf]
                  %1004 = vst [vmem:[%s994 + $0x10] sm:$0xf] %v1003
                  %v1005 = vld [vmem:[%s993 + $0x14] sm:$0xf]
                  %1006 = vst [vmem:[%s994 + $0x14] sm:$0xf] %v1005
                  %v1007 = vld [vmem:[%s993 + $0x18] sm:$0xf]
                  %1008 = vst [vmem:[%s994 + $0x18] sm:$0xf] %v1007
                  %v1009 = vld [vmem:[%s993 + $0x1c] sm:$0xf]
                  %1010 = vst [vmem:[%s994 + $0x1c] sm:$0xf] %v1009
                  %v1011 = vld [vmem:[%s993 + $0x20] sm:$0xf]
                  %1012 = vst [vmem:[%s994 + $0x20] sm:$0xf] %v1011
                  %v1013 = vld [vmem:[%s993 + $0x24] sm:$0xf]
                  %1014 = vst [vmem:[%s994 + $0x24] sm:$0xf] %v1013
                  %v1015 = vld [vmem:[%s993 + $0x28] sm:$0xf]
                  %1016 = vst [vmem:[%s994 + $0x28] sm:$0xf] %v1015
                  %v1017 = vld [vmem:[%s993 + $0x2c] sm:$0xf]
                  %1018 = vst [vmem:[%s994 + $0x2c] sm:$0xf] %v1017
                  %v1019 = vld [vmem:[%s993 + $0x30] sm:$0xf]
                  %1020 = vst [vmem:[%s994 + $0x30] sm:$0xf] %v1019
                  %v1021 = vld [vmem:[%s993 + $0x34] sm:$0xf]
                  %1022 = vst [vmem:[%s994 + $0x34] sm:$0xf] %v1021
                  %v1023 = vld [vmem:[%s993 + $0x38] sm:$0xf]
                  %1024 = vst [vmem:[%s994 + $0x38] sm:$0xf] %v1023
                  %v1025 = vld [vmem:[%s993 + $0x3c] sm:$0xf]
                  %1026 = vst [vmem:[%s994 + $0x3c] sm:$0xf] %v1025
                  %v1027 = vld [vmem:[%s993 + $0x40] sm:$0xf]
                  %1028 = vst [vmem:[%s994 + $0x80] sm:$0xf] %v1027
                  %v1029 = vld [vmem:[%s993 + $0x44] sm:$0xf]
                  %1030 = vst [vmem:[%s994 + $0x84] sm:$0xf] %v1029
                  %v1031 = vld [vmem:[%s993 + $0x48] sm:$0xf]
                  %1032 = vst [vmem:[%s994 + $0x88] sm:$0xf] %v1031
                  %v1033 = vld [vmem:[%s993 + $0x4c] sm:$0xf]
                  %1034 = vst [vmem:[%s994 + $0x8c] sm:$0xf] %v1033
                  %v1035 = vld [vmem:[%s993 + $0x50] sm:$0xf]
                  %1036 = vst [vmem:[%s994 + $0x90] sm:$0xf] %v1035
                  %v1037 = vld [vmem:[%s993 + $0x54] sm:$0xf]
                  %1038 = vst [vmem:[%s994 + $0x94] sm:$0xf] %v1037
                  %v1039 = vld [vmem:[%s993 + $0x58] sm:$0xf]
                  %1040 = vst [vmem:[%s994 + $0x98] sm:$0xf] %v1039
                  %v1041 = vld [vmem:[%s993 + $0x5c] sm:$0xf]
                  %1042 = vst [vmem:[%s994 + $0x9c] sm:$0xf] %v1041
                  %v1043 = vld [vmem:[%s993 + $0x60] sm:$0xf]
                  %1044 = vst [vmem:[%s994 + $0xa0] sm:$0xf] %v1043
                  %v1045 = vld [vmem:[%s993 + $0x64] sm:$0xf]
                  %1046 = vst [vmem:[%s994 + $0xa4] sm:$0xf] %v1045
                  %v1047 = vld [vmem:[%s993 + $0x68] sm:$0xf]
                  %1048 = vst [vmem:[%s994 + $0xa8] sm:$0xf] %v1047
                  %v1049 = vld [vmem:[%s993 + $0x6c] sm:$0xf]
                  %1050 = vst [vmem:[%s994 + $0xac] sm:$0xf] %v1049
                  %v1051 = vld [vmem:[%s993 + $0x70] sm:$0xf]
                  %1052 = vst [vmem:[%s994 + $0xb0] sm:$0xf] %v1051
                  %v1053 = vld [vmem:[%s993 + $0x74] sm:$0xf]
                  %1054 = vst [vmem:[%s994 + $0xb4] sm:$0xf] %v1053
                  %v1055 = vld [vmem:[%s993 + $0x78] sm:$0xf]
                  %1056 = vst [vmem:[%s994 + $0xb8] sm:$0xf] %v1055
                  %v1057 = vld [vmem:[%s993 + $0x7c] sm:$0xf]
                  %1058 = vst [vmem:[%s994 + $0xbc] sm:$0xf] %v1057
                  %v1059 = vld [vmem:[%s993 + $0x80] sm:$0xf]
                  %1060 = vst [vmem:[%s994 + $0x100] sm:$0xf] %v1059
                  %v1061 = vld [vmem:[%s993 + $0x84] sm:$0xf]
                  %1062 = vst [vmem:[%s994 + $0x104] sm:$0xf] %v1061
                  %v1063 = vld [vmem:[%s993 + $0x88] sm:$0xf]
                  %1064 = vst [vmem:[%s994 + $0x108] sm:$0xf] %v1063
                  %v1065 = vld [vmem:[%s993 + $0x8c] sm:$0xf]
                  %1066 = vst [vmem:[%s994 + $0x10c] sm:$0xf] %v1065
                  %v1067 = vld [vmem:[%s993 + $0x90] sm:$0xf]
                  %1068 = vst [vmem:[%s994 + $0x110] sm:$0xf] %v1067
                  %v1069 = vld [vmem:[%s993 + $0x94] sm:$0xf]
                  %1070 = vst [vmem:[%s994 + $0x114] sm:$0xf] %v1069
                  %v1071 = vld [vmem:[%s993 + $0x98] sm:$0xf]
                  %1072 = vst [vmem:[%s994 + $0x118] sm:$0xf] %v1071
                  %v1073 = vld [vmem:[%s993 + $0x9c] sm:$0xf]
                  %1074 = vst [vmem:[%s994 + $0x11c] sm:$0xf] %v1073
                  %v1075 = vld [vmem:[%s993 + $0xa0] sm:$0xf]
                  %1076 = vst [vmem:[%s994 + $0x120] sm:$0xf] %v1075
                  %v1077 = vld [vmem:[%s993 + $0xa4] sm:$0xf]
                  %1078 = vst [vmem:[%s994 + $0x124] sm:$0xf] %v1077
                  %v1079 = vld [vmem:[%s993 + $0xa8] sm:$0xf]
                  %1080 = vst [vmem:[%s994 + $0x128] sm:$0xf] %v1079
                  %v1081 = vld [vmem:[%s993 + $0xac] sm:$0xf]
                  %1082 = vst [vmem:[%s994 + $0x12c] sm:$0xf] %v1081
                  %v1083 = vld [vmem:[%s993 + $0xb0] sm:$0xf]
                  %1084 = vst [vmem:[%s994 + $0x130] sm:$0xf] %v1083
                  %v1085 = vld [vmem:[%s993 + $0xb4] sm:$0xf]
                  %1086 = vst [vmem:[%s994 + $0x134] sm:$0xf] %v1085
                  %v1087 = vld [vmem:[%s993 + $0xb8] sm:$0xf]
                  %1088 = vst [vmem:[%s994 + $0x138] sm:$0xf] %v1087
                  %v1089 = vld [vmem:[%s993 + $0xbc] sm:$0xf]
                  %1090 = vst [vmem:[%s994 + $0x13c] sm:$0xf] %v1089
                  %v1091 = vld [vmem:[%s993 + $0xc0] sm:$0xf]
                  %1092 = vst [vmem:[%s994 + $0x180] sm:$0xf] %v1091
                  %v1093 = vld [vmem:[%s993 + $0xc4] sm:$0xf]
                  %1094 = vst [vmem:[%s994 + $0x184] sm:$0xf] %v1093
                  %v1095 = vld [vmem:[%s993 + $0xc8] sm:$0xf]
                  %1096 = vst [vmem:[%s994 + $0x188] sm:$0xf] %v1095
                  %v1097 = vld [vmem:[%s993 + $0xcc] sm:$0xf]
                  %1098 = vst [vmem:[%s994 + $0x18c] sm:$0xf] %v1097
                  %v1099 = vld [vmem:[%s993 + $0xd0] sm:$0xf]
                  %1100 = vst [vmem:[%s994 + $0x190] sm:$0xf] %v1099
                  %v1101 = vld [vmem:[%s993 + $0xd4] sm:$0xf]
                  %1102 = vst [vmem:[%s994 + $0x194] sm:$0xf] %v1101
                  %v1103 = vld [vmem:[%s993 + $0xd8] sm:$0xf]
                  %1104 = vst [vmem:[%s994 + $0x198] sm:$0xf] %v1103
                  %v1105 = vld [vmem:[%s993 + $0xdc] sm:$0xf]
                  %1106 = vst [vmem:[%s994 + $0x19c] sm:$0xf] %v1105
                  %v1107 = vld [vmem:[%s993 + $0xe0] sm:$0xf]
                  %1108 = vst [vmem:[%s994 + $0x1a0] sm:$0xf] %v1107
                  %v1109 = vld [vmem:[%s993 + $0xe4] sm:$0xf]
                  %1110 = vst [vmem:[%s994 + $0x1a4] sm:$0xf] %v1109
                  %v1111 = vld [vmem:[%s993 + $0xe8] sm:$0xf]
                  %1112 = vst [vmem:[%s994 + $0x1a8] sm:$0xf] %v1111
                  %v1113 = vld [vmem:[%s993 + $0xec] sm:$0xf]
                  %1114 = vst [vmem:[%s994 + $0x1ac] sm:$0xf] %v1113
                  %v1115 = vld [vmem:[%s993 + $0xf0] sm:$0xf]
                  %1116 = vst [vmem:[%s994 + $0x1b0] sm:$0xf] %v1115
                  %v1117 = vld [vmem:[%s993 + $0xf4] sm:$0xf]
                  %1118 = vst [vmem:[%s994 + $0x1b4] sm:$0xf] %v1117
                  %v1119 = vld [vmem:[%s993 + $0xf8] sm:$0xf]
                  %1120 = vst [vmem:[%s994 + $0x1b8] sm:$0xf] %v1119
                  %v1121 = vld [vmem:[%s993 + $0xfc] sm:$0xf]
                  %1122 = vst [vmem:[%s994 + $0x1bc] sm:$0xf] %v1121
                $region71: #{tpu_custom_call.1} parent=58 // loop_footer
                  %s992 = sadd.s32 1, %s988
                $region72: #{tpu_custom_call.1} parent=58 // loop_footer_branch
                  %987 = sbr.rel target = $region68
                $region73: #{tpu_custom_call.1} parent=58 // loop_exit
                  _
              $region59: #{tpu_custom_call.1} parent=43 // pred_fallthru
                _
            $region44: #{tpu_custom_call.1} parent=39 // pred_fallthru
              _
            // Predicated region
            $region45: #{tpu_custom_call.1} parent=39 // pred_check
              _
            $region46: #{tpu_custom_call.1} parent=39 // pred_check_branch
              %838 = sbr.rel (0) target = $region48
            $region47: #{tpu_custom_call.1} parent=39 // pred_region
              loop: start=0, step=1, limit=1
              $region49: #{tpu_custom_call.1} parent=47 // loop_pre_header
                _
              $region50: #{tpu_custom_call.1} parent=47 // loop_header
                %s841 = sphi 0, %s845
                %p842 = scmp.ge.s32.totalorder %s841, 1
                %s846 = sphi %s826, %s826
                %s847 = sphi %s832, %s832
              $region51: #{tpu_custom_call.1} parent=47 // loop_header_branch
                %844 = sbr.rel (%p842) target = $region55
              $region52: #{tpu_custom_call.1} parent=47 // loop_body
                %v848 = vld [vmem:[%s846] sm:$0xf]
                %849 = vst [vmem:[%s847] sm:$0xf] %v848
                %v850 = vld [vmem:[%s846 + $0x4] sm:$0xf]
                %851 = vst [vmem:[%s847 + $0x4] sm:$0xf] %v850
                %v852 = vld [vmem:[%s846 + $0x8] sm:$0xf]
                %853 = vst [vmem:[%s847 + $0x8] sm:$0xf] %v852
                %v854 = vld [vmem:[%s846 + $0xc] sm:$0xf]
                %855 = vst [vmem:[%s847 + $0xc] sm:$0xf] %v854
                %v856 = vld [vmem:[%s846 + $0x10] sm:$0xf]
                %857 = vst [vmem:[%s847 + $0x10] sm:$0xf] %v856
                %v858 = vld [vmem:[%s846 + $0x14] sm:$0xf]
                %859 = vst [vmem:[%s847 + $0x14] sm:$0xf] %v858
                %v860 = vld [vmem:[%s846 + $0x18] sm:$0xf]
                %861 = vst [vmem:[%s847 + $0x18] sm:$0xf] %v860
                %v862 = vld [vmem:[%s846 + $0x1c] sm:$0xf]
                %863 = vst [vmem:[%s847 + $0x1c] sm:$0xf] %v862
                %v864 = vld [vmem:[%s846 + $0x20] sm:$0xf]
                %865 = vst [vmem:[%s847 + $0x20] sm:$0xf] %v864
                %v866 = vld [vmem:[%s846 + $0x24] sm:$0xf]
                %867 = vst [vmem:[%s847 + $0x24] sm:$0xf] %v866
                %v868 = vld [vmem:[%s846 + $0x28] sm:$0xf]
                %869 = vst [vmem:[%s847 + $0x28] sm:$0xf] %v868
                %v870 = vld [vmem:[%s846 + $0x2c] sm:$0xf]
                %871 = vst [vmem:[%s847 + $0x2c] sm:$0xf] %v870
                %v872 = vld [vmem:[%s846 + $0x30] sm:$0xf]
                %873 = vst [vmem:[%s847 + $0x30] sm:$0xf] %v872
                %v874 = vld [vmem:[%s846 + $0x34] sm:$0xf]
                %875 = vst [vmem:[%s847 + $0x34] sm:$0xf] %v874
                %v876 = vld [vmem:[%s846 + $0x38] sm:$0xf]
                %877 = vst [vmem:[%s847 + $0x38] sm:$0xf] %v876
                %v878 = vld [vmem:[%s846 + $0x3c] sm:$0xf]
                %879 = vst [vmem:[%s847 + $0x3c] sm:$0xf] %v878
                %v880 = vld [vmem:[%s846 + $0x40] sm:$0xf]
                %881 = vst [vmem:[%s847 + $0x80] sm:$0xf] %v880
                %v882 = vld [vmem:[%s846 + $0x44] sm:$0xf]
                %883 = vst [vmem:[%s847 + $0x84] sm:$0xf] %v882
                %v884 = vld [vmem:[%s846 + $0x48] sm:$0xf]
                %885 = vst [vmem:[%s847 + $0x88] sm:$0xf] %v884
                %v886 = vld [vmem:[%s846 + $0x4c] sm:$0xf]
                %887 = vst [vmem:[%s847 + $0x8c] sm:$0xf] %v886
                %v888 = vld [vmem:[%s846 + $0x50] sm:$0xf]
                %889 = vst [vmem:[%s847 + $0x90] sm:$0xf] %v888
                %v890 = vld [vmem:[%s846 + $0x54] sm:$0xf]
                %891 = vst [vmem:[%s847 + $0x94] sm:$0xf] %v890
                %v892 = vld [vmem:[%s846 + $0x58] sm:$0xf]
                %893 = vst [vmem:[%s847 + $0x98] sm:$0xf] %v892
                %v894 = vld [vmem:[%s846 + $0x5c] sm:$0xf]
                %895 = vst [vmem:[%s847 + $0x9c] sm:$0xf] %v894
                %v896 = vld [vmem:[%s846 + $0x60] sm:$0xf]
                %897 = vst [vmem:[%s847 + $0xa0] sm:$0xf] %v896
                %v898 = vld [vmem:[%s846 + $0x64] sm:$0xf]
                %899 = vst [vmem:[%s847 + $0xa4] sm:$0xf] %v898
                %v900 = vld [vmem:[%s846 + $0x68] sm:$0xf]
                %901 = vst [vmem:[%s847 + $0xa8] sm:$0xf] %v900
                %v902 = vld [vmem:[%s846 + $0x6c] sm:$0xf]
                %903 = vst [vmem:[%s847 + $0xac] sm:$0xf] %v902
                %v904 = vld [vmem:[%s846 + $0x70] sm:$0xf]
                %905 = vst [vmem:[%s847 + $0xb0] sm:$0xf] %v904
                %v906 = vld [vmem:[%s846 + $0x74] sm:$0xf]
                %907 = vst [vmem:[%s847 + $0xb4] sm:$0xf] %v906
                %v908 = vld [vmem:[%s846 + $0x78] sm:$0xf]
                %909 = vst [vmem:[%s847 + $0xb8] sm:$0xf] %v908
                %v910 = vld [vmem:[%s846 + $0x7c] sm:$0xf]
                %911 = vst [vmem:[%s847 + $0xbc] sm:$0xf] %v910
                %v912 = vld [vmem:[%s846 + $0x80] sm:$0xf]
                %913 = vst [vmem:[%s847 + $0x100] sm:$0xf] %v912
                %v914 = vld [vmem:[%s846 + $0x84] sm:$0xf]
                %915 = vst [vmem:[%s847 + $0x104] sm:$0xf] %v914
                %v916 = vld [vmem:[%s846 + $0x88] sm:$0xf]
                %917 = vst [vmem:[%s847 + $0x108] sm:$0xf] %v916
                %v918 = vld [vmem:[%s846 + $0x8c] sm:$0xf]
                %919 = vst [vmem:[%s847 + $0x10c] sm:$0xf] %v918
                %v920 = vld [vmem:[%s846 + $0x90] sm:$0xf]
                %921 = vst [vmem:[%s847 + $0x110] sm:$0xf] %v920
                %v922 = vld [vmem:[%s846 + $0x94] sm:$0xf]
                %923 = vst [vmem:[%s847 + $0x114] sm:$0xf] %v922
                %v924 = vld [vmem:[%s846 + $0x98] sm:$0xf]
                %925 = vst [vmem:[%s847 + $0x118] sm:$0xf] %v924
                %v926 = vld [vmem:[%s846 + $0x9c] sm:$0xf]
                %927 = vst [vmem:[%s847 + $0x11c] sm:$0xf] %v926
                %v928 = vld [vmem:[%s846 + $0xa0] sm:$0xf]
                %929 = vst [vmem:[%s847 + $0x120] sm:$0xf] %v928
                %v930 = vld [vmem:[%s846 + $0xa4] sm:$0xf]
                %931 = vst [vmem:[%s847 + $0x124] sm:$0xf] %v930
                %v932 = vld [vmem:[%s846 + $0xa8] sm:$0xf]
                %933 = vst [vmem:[%s847 + $0x128] sm:$0xf] %v932
                %v934 = vld [vmem:[%s846 + $0xac] sm:$0xf]
                %935 = vst [vmem:[%s847 + $0x12c] sm:$0xf] %v934
                %v936 = vld [vmem:[%s846 + $0xb0] sm:$0xf]
                %937 = vst [vmem:[%s847 + $0x130] sm:$0xf] %v936
                %v938 = vld [vmem:[%s846 + $0xb4] sm:$0xf]
                %939 = vst [vmem:[%s847 + $0x134] sm:$0xf] %v938
                %v940 = vld [vmem:[%s846 + $0xb8] sm:$0xf]
                %941 = vst [vmem:[%s847 + $0x138] sm:$0xf] %v940
                %v942 = vld [vmem:[%s846 + $0xbc] sm:$0xf]
                %943 = vst [vmem:[%s847 + $0x13c] sm:$0xf] %v942
                %v944 = vld [vmem:[%s846 + $0xc0] sm:$0xf]
                %945 = vst [vmem:[%s847 + $0x180] sm:$0xf] %v944
                %v946 = vld [vmem:[%s846 + $0xc4] sm:$0xf]
                %947 = vst [vmem:[%s847 + $0x184] sm:$0xf] %v946
                %v948 = vld [vmem:[%s846 + $0xc8] sm:$0xf]
                %949 = vst [vmem:[%s847 + $0x188] sm:$0xf] %v948
                %v950 = vld [vmem:[%s846 + $0xcc] sm:$0xf]
                %951 = vst [vmem:[%s847 + $0x18c] sm:$0xf] %v950
                %v952 = vld [vmem:[%s846 + $0xd0] sm:$0xf]
                %953 = vst [vmem:[%s847 + $0x190] sm:$0xf] %v952
                %v954 = vld [vmem:[%s846 + $0xd4] sm:$0xf]
                %955 = vst [vmem:[%s847 + $0x194] sm:$0xf] %v954
                %v956 = vld [vmem:[%s846 + $0xd8] sm:$0xf]
                %957 = vst [vmem:[%s847 + $0x198] sm:$0xf] %v956
                %v958 = vld [vmem:[%s846 + $0xdc] sm:$0xf]
                %959 = vst [vmem:[%s847 + $0x19c] sm:$0xf] %v958
                %v960 = vld [vmem:[%s846 + $0xe0] sm:$0xf]
                %961 = vst [vmem:[%s847 + $0x1a0] sm:$0xf] %v960
                %v962 = vld [vmem:[%s846 + $0xe4] sm:$0xf]
                %963 = vst [vmem:[%s847 + $0x1a4] sm:$0xf] %v962
                %v964 = vld [vmem:[%s846 + $0xe8] sm:$0xf]
                %965 = vst [vmem:[%s847 + $0x1a8] sm:$0xf] %v964
                %v966 = vld [vmem:[%s846 + $0xec] sm:$0xf]
                %967 = vst [vmem:[%s847 + $0x1ac] sm:$0xf] %v966
                %v968 = vld [vmem:[%s846 + $0xf0] sm:$0xf]
                %969 = vst [vmem:[%s847 + $0x1b0] sm:$0xf] %v968
                %v970 = vld [vmem:[%s846 + $0xf4] sm:$0xf]
                %971 = vst [vmem:[%s847 + $0x1b4] sm:$0xf] %v970
                %v972 = vld [vmem:[%s846 + $0xf8] sm:$0xf]
                %973 = vst [vmem:[%s847 + $0x1b8] sm:$0xf] %v972
                %v974 = vld [vmem:[%s846 + $0xfc] sm:$0xf]
                %975 = vst [vmem:[%s847 + $0x1bc] sm:$0xf] %v974
              $region53: #{tpu_custom_call.1} parent=47 // loop_footer
                %s845 = sadd.s32 1, %s841
              $region54: #{tpu_custom_call.1} parent=47 // loop_footer_branch
                %840 = sbr.rel target = $region50
              $region55: #{tpu_custom_call.1} parent=47 // loop_exit
                _
            $region48: #{tpu_custom_call.1} parent=39 // pred_fallthru
              _
          $region40: #{tpu_custom_call.1} parent=35 // pred_fallthru
            _
          %1123 = vnop
        $region36: #{tpu_custom_call.1} parent=31 // pred_fallthru
          _
      $region32: #{tpu_custom_call.1} parent=5 // pred_fallthru
        _
      %p1124 = scmp.le.s32.totalorder 2, %s9
      // Predicated region
      $region74: #{tpu_custom_call.1} parent=5 // pred_check
        %p1125 = pneg %p1124
      $region75: #{tpu_custom_call.1} parent=5 // pred_check_branch
        %1127 = sbr.rel (%p1125) target = $region77
      $region76: #{tpu_custom_call.1} parent=5 // pred_region
        %s1128 = ssub.s32 %s9, 2
        // Predicated region
        $region78: #{tpu_custom_call.1} parent=76 // pred_check
          %p1129 = pneg %p106
        $region79: #{tpu_custom_call.1} parent=76 // pred_check_branch
          %1131 = sbr.rel (%p1129) target = $region81
        $region80: #{tpu_custom_call.1} parent=76 // pred_region
          %s1132 = sand.u32 %s91, 1
          %s1133 = sand.u32 %s91, 1
          %s1134 = smul.addr %s1133, 256
          %s1135 = scalar_lea.vmem [#allocation2], %s1134
        $region81: #{tpu_custom_call.1} parent=76 // pred_fallthru
          _
      $region77: #{tpu_custom_call.1} parent=5 // pred_fallthru
        _
    $region6: #{tpu_custom_call.1} parent=1 // loop_footer
      %s13 = sadd.s32 1, %s9
    $region7: #{tpu_custom_call.1} parent=1 // loop_footer_branch
      %8 = sbr.rel target = $region3
    $region8: #{tpu_custom_call.1} parent=1 // loop_exit
      _

</llo_original>
